<compile_context>
chip_gen: v7x
topology: tpu7x:2x2x1
jax: 0.10.0
libtpu: 0.0.40
codegen_flags: <defaults>
</compile_context>

<pallas_src>
import jax
import jax.numpy as jnp
from jax.experimental import pallas as pl
from jax.experimental.pallas import tpu as pltpu

_LANE = 128
_SINGLE_BLOCK_BYTES = 1 * 1024 * 1024      # <= 1 MiB/operand -> single full-array block
_TARGET_BLOCK_BYTES = 2 * 1024 * 1024      # ~2 MiB per pipeline buffer on the grid path
_VMEM_LIMIT_BYTES = 48 * 1024 * 1024       # 3 ops x 2 bufs x 2 MiB = 12 MiB, ample headroom


def _add_kernel(a_ref, b_ref, o_ref):
    o_ref[...] = a_ref[...] + b_ref[...]


def _lane_dense_view(n_elems: int):
    """Widest lane-dense last dim (multiple of 128) that divides n_elems.

    Returns (width, pad). pad > 0 only when no multiple of 128 divides n_elems,
    in which case we pad the flat length to a multiple of 1024 (8 x 128).
    """
    for width in (1024, 512, 256, 128):
        if n_elems % width == 0:
            return width, 0
    width = 1024
    pad = (-n_elems) % width
    return width, pad


def residual_add(x217: jax.Array, x203: jax.Array) -> jax.Array:
    assert x217.shape == x203.shape and x217.dtype == x203.dtype
    orig_shape = x217.shape
    dtype = x217.dtype
    n_elems = x217.size
    itemsize = jnp.dtype(dtype).itemsize

    width, pad = _lane_dense_view(n_elems)
    a = x217.reshape(-1)
    b = x203.reshape(-1)
    if pad:
        # TODO(synk): only hit when the flat size is not a multiple of 128; this
        # materializes a padded copy (unavoidable for a lane-dense slab).
        a = jnp.pad(a, (0, pad))
        b = jnp.pad(b, (0, pad))
    rows = (n_elems + pad) // width
    flat_shape = (rows, width)
    a2 = a.reshape(flat_shape)   # contiguous row-major reshape: layout-only, no copy
    b2 = b.reshape(flat_shape)
    per_operand_bytes = rows * width * itemsize

    cost = pl.CostEstimate(
        flops=n_elems,
        transcendentals=0,
        bytes_accessed=3 * n_elems * itemsize,
    )

    if per_operand_bytes <= _SINGLE_BLOCK_BYTES:
        # Small slab (this module: 49 x 512 fp32 ~= 98 KiB): single full-array
        # block, no grid -> zero per-step pipelining overhead.
        out = pl.pallas_call(
            _add_kernel,
            out_shape=jax.ShapeDtypeStruct(flat_shape, dtype),
            in_specs=[
                pl.BlockSpec(flat_shape, lambda: (0, 0)),
                pl.BlockSpec(flat_shape, lambda: (0, 0)),
            ],
            out_specs=pl.BlockSpec(flat_shape, lambda: (0, 0)),
            cost_estimate=cost,
        )(a2, b2)
    else:
        # Large slab: 1-D row grid, ~2 MiB lane-dense blocks, ragged final block
        # handled by Pallas (masked stores) -> no whole-array pad/slice copies.
        block_rows = max(8, (_TARGET_BLOCK_BYTES // (width * itemsize)) // 8 * 8)
        blk = pl.BlockSpec((block_rows, width), lambda i: (i, 0))
        out = pl.pallas_call(
            _add_kernel,
            out_shape=jax.ShapeDtypeStruct(flat_shape, dtype),
            grid=(pl.cdiv(rows, block_rows),),
            in_specs=[blk, blk],
            out_specs=blk,
            cost_estimate=cost,
            compiler_params=pltpu.CompilerParams(
                dimension_semantics=("parallel",),
                vmem_limit_bytes=_VMEM_LIMIT_BYTES,
            ),
        )(a2, b2)

    out_flat = out.reshape(-1)
    if pad:
        out_flat = out_flat[:n_elems]
    return out_flat.reshape(orig_shape)


if __name__ == "__main__":
    key = jax.random.PRNGKey(0)
    k1, k2, k3, k4 = jax.random.split(key, 4)

    # Shapes consistent with the module's forward: NCHW (1, 128, 14, 14).
    x217 = jax.random.normal(k1, (1, 128, 14, 14), dtype=jnp.float32)
    x203 = jax.random.normal(k2, (1, 128, 14, 14), dtype=jnp.float32)

    y = residual_add(x217, x203)
    jax.block_until_ready(y)
    ref = x217 + x203
    assert y.shape == (1, 128, 14, 14)
    assert jnp.allclose(y, ref, atol=1e-6, rtol=1e-6)

    # Exercise the pipelined grid path once (8 MiB/operand -> 4-step row grid).
    xa = jax.random.normal(k3, (4, 128, 64, 64), dtype=jnp.float32)
    xb = jax.random.normal(k4, (4, 128, 64, 64), dtype=jnp.float32)
    yb = residual_add(xa, xb)
    jax.block_until_ready(yb)
    assert jnp.allclose(yb, xa + xb, atol=1e-6, rtol=1e-6)

    print("KERNEL_OK")
</pallas_src>

<mosaic_0001>
module attributes {stable_mosaic.version = 11 : i64} {
  func.func @_add_kernel(%arg0: memref<49x512xf32, #tpu.memory_space<vmem>>, %arg1: memref<49x512xf32, #tpu.memory_space<vmem>>, %arg2: memref<49x512xf32, #tpu.memory_space<vmem>>) attributes {dimension_semantics = [], scalar_prefetch = 0 : i64, scratch_operands = 0 : i64, tpu.core_type = #tpu.core_type<tc>} {
    %c0 = arith.constant 0 : index
    %c0_0 = arith.constant 0 : index
    %0 = vector.load %arg0[%c0, %c0_0] : memref<49x512xf32, #tpu.memory_space<vmem>>, vector<49x512xf32>
    %c0_1 = arith.constant 0 : index
    %c0_2 = arith.constant 0 : index
    %1 = vector.load %arg1[%c0_1, %c0_2] : memref<49x512xf32, #tpu.memory_space<vmem>>, vector<49x512xf32>
    %2 = arith.addf %0, %1 : vector<49x512xf32>
    %c0_3 = arith.constant 0 : index
    %c0_4 = arith.constant 0 : index
    %3 = vector.load %arg2[%c0_3, %c0_4] : memref<49x512xf32, #tpu.memory_space<vmem>>, vector<49x512xf32>
    tpu.vector_store %arg2[%c0_3, %c0_4], %2 {strides = array<i32>} : memref<49x512xf32, #tpu.memory_space<vmem>>, vector<49x512xf32>,
    return
  }
}

</mosaic_0001>

<llo_original>
// kernel: tpu_custom_call.1
$region0: #{tpu_custom_call.1}
  #allocation0 [shape = 'u32[]', space=smem, size = 0x4, offset = 0x4, fixed_abs, tag = 'smem constant byte address 0x4 - core index']
  #allocation1 [shape = 'u32[144,128]{1,0:T(1,128)}', space=vmem, size = 0x12000, scoped, tag = 'internal scratch']
  %s0 = inlined_call_operand.hbm [shape: f32[49,512], index: 0, kind: input, shape index: {}]
  %s1 = inlined_call_operand.hbm [shape: f32[49,512], index: 1, kind: input, shape index: {}]
  %s2 = inlined_call_operand.hbm [shape: f32[49,512], index: 2, kind: output, shape index: {}]
  %s3 = sld [smem:[#allocation0]]
  $region26: #{tpu_custom_call.1} parent=0
    _
  %s5 = ssub.s32 1, %s3
  %s6 = scalar_select 0, %s5, %s3
  $region1: #{tpu_custom_call.1} parent=0
    #allocation2 [shape = 'u8[114688]{0}', space=vmem, size = 0x1c000, scoped, tag = 'input window, operand 0, single buffered']
    #allocation3 [shape = 's32[1]{0}', space=sflag, size = 0x4, scoped, tag = 'scoped memory for tpu_custom_call.1']
    #allocation4 [shape = 's32[1]{0}', space=sflag, size = 0x4, scoped, tag = 'scoped memory for tpu_custom_call.1']
    #allocation5 [shape = 'u8[114688]{0}', space=vmem, size = 0x1c000, scoped, tag = 'input window, operand 1, single buffered']
    #allocation6 [shape = 's32[1]{0}', space=sflag, size = 0x4, scoped, tag = 'scoped memory for tpu_custom_call.1']
    #allocation7 [shape = 'u8[114688]{0}', space=vmem, size = 0x1c000, scoped, tag = 'output window, operand 0, single buffered']
    %7 = vsyncpa [#allocation3], 0
    %8 = vsyncpa [#allocation6], 0
    %9 = vsyncpa [#allocation4], 0
    // Predicated region
    $region2: #{tpu_custom_call.1} parent=1 // pred_check
      _
    $region3: #{tpu_custom_call.1} parent=1 // pred_check_branch
      %11 = sbr.rel (0) target = $region5
    $region4: #{tpu_custom_call.1} parent=1 // pred_region
      %s13 = ssub.s32 3584, 3584
      %14 = vsyncadd [#allocation3], %s13
      %s15 = sshll.u32 [#allocation2], 4
      %s16 = int_to_ptr.vmem [resolvable:$true] %s15
      %21 = dma.hbm_to_vmem [thread:$0]  %s0, 3584, %s16, [#allocation3], 512, 512, 32
    $region5: #{tpu_custom_call.1} parent=1 // pred_fallthru
      _
    // Predicated region
    $region6: #{tpu_custom_call.1} parent=1 // pred_check
      _
    $region7: #{tpu_custom_call.1} parent=1 // pred_check_branch
      %23 = sbr.rel (0) target = $region9
    $region8: #{tpu_custom_call.1} parent=1 // pred_region
      %s25 = ssub.s32 3584, 3584
      %26 = vsyncadd [#allocation6], %s25
      %s27 = sshll.u32 [#allocation5], 4
      %s28 = int_to_ptr.vmem [resolvable:$true] %s27
      %33 = dma.hbm_to_vmem [thread:$0]  %s1, 3584, %s28, [#allocation6], 512, 512, 32
    $region9: #{tpu_custom_call.1} parent=1 // pred_fallthru
      _
    // Predicated region
    $region10: #{tpu_custom_call.1} parent=1 // pred_check
      _
    $region11: #{tpu_custom_call.1} parent=1 // pred_check_branch
      %35 = sbr.rel (0) target = $region13
    $region12: #{tpu_custom_call.1} parent=1 // pred_region
      %36 = dma.done [#allocation3], 3584
    $region13: #{tpu_custom_call.1} parent=1 // pred_fallthru
      _
    // Predicated region
    $region14: #{tpu_custom_call.1} parent=1 // pred_check
      _
    $region15: #{tpu_custom_call.1} parent=1 // pred_check_branch
      %38 = sbr.rel (0) target = $region17
    $region16: #{tpu_custom_call.1} parent=1 // pred_region
      %39 = dma.done [#allocation6], 3584
    $region17: #{tpu_custom_call.1} parent=1 // pred_fallthru
      _
    %v40 = vld [vmem:[#allocation2] sm:$0xff]
    %v41 = vld [vmem:[#allocation2 + $0x8] sm:$0xff]
    %v42 = vld [vmem:[#allocation2 + $0x10] sm:$0xff]
    %v43 = vld [vmem:[#allocation2 + $0x18] sm:$0xff]
    %v44 = vld [vmem:[#allocation2 + $0x20] sm:$0xff]
    %v45 = vld [vmem:[#allocation2 + $0x28] sm:$0xff]
    %v46 = vld [vmem:[#allocation2 + $0x30] sm:$0xff]
    %v47 = vld [vmem:[#allocation2 + $0x38] sm:$0xff]
    %v48 = vld [vmem:[#allocation2 + $0x40] sm:$0xff]
    %v49 = vld [vmem:[#allocation2 + $0x48] sm:$0xff]
    %v50 = vld [vmem:[#allocation2 + $0x50] sm:$0xff]
    %v51 = vld [vmem:[#allocation2 + $0x58] sm:$0xff]
    %v52 = vld [vmem:[#allocation2 + $0x60] sm:$0xff]
    %v53 = vld [vmem:[#allocation2 + $0x68] sm:$0xff]
    %v54 = vld [vmem:[#allocation2 + $0x70] sm:$0xff]
    %v55 = vld [vmem:[#allocation2 + $0x78] sm:$0xff]
    %v56 = vld [vmem:[#allocation2 + $0x80] sm:$0xff]
    %v57 = vld [vmem:[#allocation2 + $0x88] sm:$0xff]
    %v58 = vld [vmem:[#allocation2 + $0x90] sm:$0xff]
    %v59 = vld [vmem:[#allocation2 + $0x98] sm:$0xff]
    %v60 = vld [vmem:[#allocation2 + $0xa0] sm:$0xff]
    %v61 = vld [vmem:[#allocation2 + $0xa8] sm:$0xff]
    %v62 = vld [vmem:[#allocation2 + $0xb0] sm:$0xff]
    %v63 = vld [vmem:[#allocation2 + $0xb8] sm:$0xff]
    %v64 = vld [vmem:[#allocation2 + $0xc0] sm:$0x1]
    %v65 = vld [vmem:[#allocation2 + $0xc8] sm:$0x1]
    %v66 = vld [vmem:[#allocation2 + $0xd0] sm:$0x1]
    %v67 = vld [vmem:[#allocation2 + $0xd8] sm:$0x1]
    %v68 = vld [vmem:[#allocation5] sm:$0xff]
    %v69 = vld [vmem:[#allocation5 + $0x8] sm:$0xff]
    %v70 = vld [vmem:[#allocation5 + $0x10] sm:$0xff]
    %v71 = vld [vmem:[#allocation5 + $0x18] sm:$0xff]
    %v72 = vld [vmem:[#allocation5 + $0x20] sm:$0xff]
    %v73 = vld [vmem:[#allocation5 + $0x28] sm:$0xff]
    %v74 = vld [vmem:[#allocation5 + $0x30] sm:$0xff]
    %v75 = vld [vmem:[#allocation5 + $0x38] sm:$0xff]
    %v76 = vld [vmem:[#allocation5 + $0x40] sm:$0xff]
    %v77 = vld [vmem:[#allocation5 + $0x48] sm:$0xff]
    %v78 = vld [vmem:[#allocation5 + $0x50] sm:$0xff]
    %v79 = vld [vmem:[#allocation5 + $0x58] sm:$0xff]
    %v80 = vld [vmem:[#allocation5 + $0x60] sm:$0xff]
    %v81 = vld [vmem:[#allocation5 + $0x68] sm:$0xff]
    %v82 = vld [vmem:[#allocation5 + $0x70] sm:$0xff]
    %v83 = vld [vmem:[#allocation5 + $0x78] sm:$0xff]
    %v84 = vld [vmem:[#allocation5 + $0x80] sm:$0xff]
    %v85 = vld [vmem:[#allocation5 + $0x88] sm:$0xff]
    %v86 = vld [vmem:[#allocation5 + $0x90] sm:$0xff]
    %v87 = vld [vmem:[#allocation5 + $0x98] sm:$0xff]
    %v88 = vld [vmem:[#allocation5 + $0xa0] sm:$0xff]
    %v89 = vld [vmem:[#allocation5 + $0xa8] sm:$0xff]
    %v90 = vld [vmem:[#allocation5 + $0xb0] sm:$0xff]
    %v91 = vld [vmem:[#allocation5 + $0xb8] sm:$0xff]
    %v92 = vld [vmem:[#allocation5 + $0xc0] sm:$0x1]
    %v93 = vld [vmem:[#allocation5 + $0xc8] sm:$0x1]
    %v94 = vld [vmem:[#allocation5 + $0xd0] sm:$0x1]
    %v95 = vld [vmem:[#allocation5 + $0xd8] sm:$0x1]
    %v96 = vadd.f32 %v40, %v68
    %v97 = vadd.f32 %v41, %v69
    %v98 = vadd.f32 %v42, %v70
    %v99 = vadd.f32 %v43, %v71
    %v100 = vadd.f32 %v44, %v72
    %v101 = vadd.f32 %v45, %v73
    %v102 = vadd.f32 %v46, %v74
    %v103 = vadd.f32 %v47, %v75
    %v104 = vadd.f32 %v48, %v76
    %v105 = vadd.f32 %v49, %v77
    %v106 = vadd.f32 %v50, %v78
    %v107 = vadd.f32 %v51, %v79
    %v108 = vadd.f32 %v52, %v80
    %v109 = vadd.f32 %v53, %v81
    %v110 = vadd.f32 %v54, %v82
    %v111 = vadd.f32 %v55, %v83
    %v112 = vadd.f32 %v56, %v84
    %v113 = vadd.f32 %v57, %v85
    %v114 = vadd.f32 %v58, %v86
    %v115 = vadd.f32 %v59, %v87
    %v116 = vadd.f32 %v60, %v88
    %v117 = vadd.f32 %v61, %v89
    %v118 = vadd.f32 %v62, %v90
    %v119 = vadd.f32 %v63, %v91
    %v120 = vadd.f32 %v64, %v92
    %v121 = vadd.f32 %v65, %v93
    %v122 = vadd.f32 %v66, %v94
    %v123 = vadd.f32 %v67, %v95
    %124 = vst [vmem:[#allocation7] sm:$0xff] %v96
    %125 = vst [vmem:[#allocation7 + $0x8] sm:$0xff] %v97
    %126 = vst [vmem:[#allocation7 + $0x10] sm:$0xff] %v98
    %127 = vst [vmem:[#allocation7 + $0x18] sm:$0xff] %v99
    %128 = vst [vmem:[#allocation7 + $0x20] sm:$0xff] %v100
    %129 = vst [vmem:[#allocation7 + $0x28] sm:$0xff] %v101
    %130 = vst [vmem:[#allocation7 + $0x30] sm:$0xff] %v102
    %131 = vst [vmem:[#allocation7 + $0x38] sm:$0xff] %v103
    %132 = vst [vmem:[#allocation7 + $0x40] sm:$0xff] %v104
    %133 = vst [vmem:[#allocation7 + $0x48] sm:$0xff] %v105
    %134 = vst [vmem:[#allocation7 + $0x50] sm:$0xff] %v106
    %135 = vst [vmem:[#allocation7 + $0x58] sm:$0xff] %v107
    %136 = vst [vmem:[#allocation7 + $0x60] sm:$0xff] %v108
    %137 = vst [vmem:[#allocation7 + $0x68] sm:$0xff] %v109
    %138 = vst [vmem:[#allocation7 + $0x70] sm:$0xff] %v110
    %139 = vst [vmem:[#allocation7 + $0x78] sm:$0xff] %v111
    %140 = vst [vmem:[#allocation7 + $0x80] sm:$0xff] %v112
    %141 = vst [vmem:[#allocation7 + $0x88] sm:$0xff] %v113
    %142 = vst [vmem:[#allocation7 + $0x90] sm:$0xff] %v114
    %143 = vst [vmem:[#allocation7 + $0x98] sm:$0xff] %v115
    %144 = vst [vmem:[#allocation7 + $0xa0] sm:$0xff] %v116
    %145 = vst [vmem:[#allocation7 + $0xa8] sm:$0xff] %v117
    %146 = vst [vmem:[#allocation7 + $0xb0] sm:$0xff] %v118
    %147 = vst [vmem:[#allocation7 + $0xb8] sm:$0xff] %v119
    %148 = vst [vmem:[#allocation7 + $0xc0] sm:$0x1] %v120
    %149 = vst [vmem:[#allocation7 + $0xc8] sm:$0x1] %v121
    %150 = vst [vmem:[#allocation7 + $0xd0] sm:$0x1] %v122
    %151 = vst [vmem:[#allocation7 + $0xd8] sm:$0x1] %v123
    // Predicated region
    $region18: #{tpu_custom_call.1} parent=1 // pred_check
      _
    $region19: #{tpu_custom_call.1} parent=1 // pred_check_branch
      %153 = sbr.rel (0) target = $region21
    $region20: #{tpu_custom_call.1} parent=1 // pred_region
      %s155 = ssub.s32 3584, 3584
      %156 = vsyncadd [#allocation4], %s155
      %s157 = sshll.u32 [#allocation7], 4
      %s158 = int_to_ptr.vmem [resolvable:$true] %s157
      %163 = dma.vmem_to_hbm [thread:$0]  %s158, 3584, %s2, [#allocation4], 512, 512, 32
    $region21: #{tpu_custom_call.1} parent=1 // pred_fallthru
      _
    // Predicated region
    $region22: #{tpu_custom_call.1} parent=1 // pred_check
      _
    $region23: #{tpu_custom_call.1} parent=1 // pred_check_branch
      %165 = sbr.rel (0) target = $region25
    $region24: #{tpu_custom_call.1} parent=1 // pred_region
      %166 = dma.done [#allocation4], 3584
    $region25: #{tpu_custom_call.1} parent=1 // pred_fallthru
      _
    %167 = vsyncpa [#allocation3], 1
    %168 = vsyncpa [#allocation6], 1
    %169 = vsyncpa [#allocation4], 1

</llo_original>
